<compile_context>
chip_gen: v7x
topology: tpu7x:2x2x1
jax: 0.10.0
libtpu: 0.0.40
codegen_flags: <defaults>
</compile_context>

<pallas_src>
import math

import jax
import jax.numpy as jnp
import jax.scipy.special as jsp
from jax.experimental import pallas as pl
from jax.experimental.pallas import tpu as pltpu

LANES = 128
SUBLANES = 8
BLOCK_ELEMS = 512 * 128            # ~256 KiB f32 per input block
FUSED_MAX_ELEMS = 128 * 1024       # <= this: single fused, fully VMEM-resident kernel
ONE_PASS_MAX_ELEMS = 4 * 1024 * 1024   # <= this (single-TC): VMEM-resident err path
ONE_PASS_VMEM_LIMIT = 40 * 1024 * 1024
MAX_NATIVE_LANES = 2048            # use the original last dim as lanes if <= this

REG_FACTOR = 0.1                   # EvidenceRegularizer default factor
EPS = 1e-8
LOG_PI = math.log(math.pi)


def _num_tensorcores():
    """2 on megacore parts (v4/v5p/v7x), 1 on v5e/v6e (and as a safe default)."""
    try:
        kind = jax.devices()[0].device_kind.lower()
    except Exception:
        return 1
    if any(t in kind for t in ("v5 lite", "v5lite", "v5e", "v6 lite", "v6lite", "v6e")):
        return 1
    if any(t in kind for t in ("v7", "v4", "v5p")):
        return 2
    return 1


# --------------------------------------------------------------------------------------
# shared per-element math (runs on (rows, lanes) f32 blocks inside the kernels)
# --------------------------------------------------------------------------------------
def _elem_math(g, nu, al, be, y):
    """Per-element (nll + reg), min(nu_eff, alpha_eff), and err.

    lgamma/digamma only appear as differences; both use a K=3 recurrence shift
    (z = a + 3) plus a short asymptotic series of the *difference*:
        lgamma(a)-lgamma(a+.5)   = log(Pnum/Pden) - .5*log(z) + 1/(8z) - 1/(192 z^3) + 1/(640 z^5)
        digamma(a+.5)-digamma(a) = 1/(2z) + 1/(8 z^2) - 1/(64 z^4)
                                   + 0.5*sum_{k<3} 1/((a+k)(a+k+.5))
    with Pden = a(a+1)(a+2), Pnum = (a+.5)(a+1.5)(a+2.5); accurate to ~1e-6 for a > ~0.1.
    NOTE: Pden*Pnum (single shared reciprocal) overflows f32 only for a >~ 2.6e6 —
    far outside any realistic evidential alpha.
    """
    err = y - g
    err2 = err * err
    one_nu = 1.0 + nu
    omega = 2.0 * be * one_nu

    z = al + 3.0
    inv_z = pl.reciprocal(z, approx=True)
    inv_z2 = inv_z * inv_z
    p_den = al * (al + 1.0) * (al + 2.0)
    p_num = (al + 0.5) * (al + 1.5) * (al + 2.5)
    # one EUP reciprocal shared by the lgamma difference and the digamma correction
    ipdn = pl.reciprocal(p_den * p_num, approx=True)          # ~ 1/(Pden*Pnum)
    inv_pd = ipdn * p_num                                     # ~ 1/Pden
    lg_poly = inv_z * (0.125 + inv_z2 * (-1.0 / 192.0 + inv_z2 * (1.0 / 640.0)))

    # nll: the -0.5*log(z) from the lgamma difference is folded into -0.5*log(nu*z)
    nll = (0.5 * LOG_PI
           - 0.5 * jnp.log(nu * z)
           - al * jnp.log(omega)
           + (al + 0.5) * jnp.log(nu * err2 + omega)
           + jnp.log(p_num * inv_pd)
           + lg_poly)
    reg = jnp.abs(err) * (2.0 * nu + al) * REG_FACTOR
    nllreg = nll + reg

    # digamma(a+0.5) - digamma(a); note d0*d1*d2 == Pden*Pnum so ipdn is reused.
    d0 = al * (al + 0.5)
    d1 = (al + 1.0) * (al + 1.5)
    d2 = (al + 2.0) * (al + 2.5)
    corr = 0.5 * (d1 * d2 + d0 * d2 + d0 * d1) * ipdn
    dig = inv_z * (0.5 + inv_z * (0.125 - inv_z2 * (1.0 / 64.0))) + corr

    # one shared reciprocal of (nu+eps)*alpha:
    #   nu_eff = beta*(1+nu)/((nu+eps)*alpha),  q = beta*(1+nu)/(nu+eps) = nu_eff*alpha
    r = pl.reciprocal((nu + EPS) * al, approx=True)
    bn = be * one_nu
    nu_eff = r * bn
    q = nu_eff * al
    alpha_eff = (jnp.exp(dig) - 1.0) * 2.0 * q
    eff = jnp.minimum(alpha_eff, nu_eff)
    return nllreg, eff, err


def _valid_mask(row0, shape, count, lanes):
    # flat element index < count  (int32 is fine for < 2^31 elements)
    r = jax.lax.broadcasted_iota(jnp.int32, shape, 0)
    l = jax.lax.broadcasted_iota(jnp.int32, shape, 1)
    return (row0 + r) * lanes + l < count


def _fold(x, op):
    """Reduce a (rows, lanes) block to (8, lanes) with a pairwise tree of 8-row slabs."""
    slabs = [x[i:i + SUBLANES] for i in range(0, x.shape[0], SUBLANES)]
    while len(slabs) > 1:
        nxt = [op(a, b) for a, b in zip(slabs[0::2], slabs[1::2])]
        if len(slabs) % 2:
            nxt.append(slabs[-1])
        slabs = nxt
    return slabs[0]


# --------------------------------------------------------------------------------------
# fused single-launch kernel (small tensors, everything VMEM-resident)
# --------------------------------------------------------------------------------------
def _make_fused_kernel(count, padded_count):
    inv_count = 1.0 / float(count)
    need_mask = padded_count != count

    def kernel(g_ref, nu_ref, al_ref, be_ref, t_ref, out_ref):
        g, nu, al, be, y = (g_ref[...], nu_ref[...], al_ref[...],
                            be_ref[...], t_ref[...])
        nllreg, eff, err = _elem_math(g, nu, al, be, y)
        if need_mask:
            valid = _valid_mask(0, g.shape, count, LANES)
            nllreg = jnp.where(valid, nllreg, 0.0)
            eff = jnp.where(valid, eff, jnp.inf)
        minb = jnp.min(jnp.min(eff, axis=1, keepdims=True), axis=0, keepdims=True)
        sqrt_minb = jnp.sqrt(minb)                            # (1,1), broadcast below
        mmse = jnp.minimum(sqrt_minb * jnp.abs(err), err * err)  # padded err==0 -> 0
        total = nllreg + mmse
        s = jnp.sum(jnp.sum(total, axis=1, keepdims=True), axis=0, keepdims=True)
        out_ref[...] = s * inv_count

    return kernel


# --------------------------------------------------------------------------------------
# one-pass VMEM-resident-err kernel (single-TC chips, mid-size tensors)
# --------------------------------------------------------------------------------------
def _make_onepass_kernel(count, lanes, br, num_tiles, need_mask):
    def kernel(g_ref, nu_ref, al_ref, be_ref, t_ref, out_ref, min_acc, err_buf):
        k = pl.program_id(0)

        @pl.when(k == 0)
        def _():
            out_ref[...] = jnp.zeros_like(out_ref)
            min_acc[...] = jnp.full_like(min_acc, jnp.inf)

        nllreg, eff, err = _elem_math(g_ref[...], nu_ref[...], al_ref[...],
                                      be_ref[...], t_ref[...])

        if need_mask:
            row0 = k * br
            partial = (row0 + br) * lanes > count   # only the last tile pays the mask

            @pl.when(partial)
            def _():
                valid = _valid_mask(row0, (br, lanes), count, lanes)
                err_buf[k] = jnp.where(valid, err, 0.0)
                out_ref[...] += _fold(jnp.where(valid, nllreg, 0.0), jnp.add)
                min_acc[...] = jnp.minimum(
                    min_acc[...], _fold(jnp.where(valid, eff, jnp.inf), jnp.minimum))

            @pl.when(jnp.logical_not(partial))
            def _():
                err_buf[k] = err
                out_ref[...] += _fold(nllreg, jnp.add)
                min_acc[...] = jnp.minimum(min_acc[...], _fold(eff, jnp.minimum))
        else:
            err_buf[k] = err
            out_ref[...] += _fold(nllreg, jnp.add)
            min_acc[...] = jnp.minimum(min_acc[...], _fold(eff, jnp.minimum))

        @pl.when(k == num_tiles - 1)
        def _():
            mb = jnp.min(jnp.min(min_acc[...], axis=1, keepdims=True),
                         axis=0, keepdims=True)
            sb = jnp.sqrt(mb)                                 # (1,1)

            def body(j, acc):
                e = err_buf[j]
                return acc + _fold(jnp.minimum(sb * jnp.abs(e), e * e), jnp.add)

            mmse = jax.lax.fori_loop(0, num_tiles, body,
                                     jnp.zeros((SUBLANES, lanes), jnp.float32))
            out_ref[...] += mmse

    return kernel


# --------------------------------------------------------------------------------------
# two-pass kernels (v7x / very large tensors)
# --------------------------------------------------------------------------------------
def _make_pass1_kernel(count, lanes, br, tpc, need_mask):
    # pass 1: reads all 5 tensors once, spills err as bf16, accumulates the (nll+reg)
    # sum and min(eff) into tiny (8, lanes) resident output blocks (one per core).
    def kernel(g_ref, nu_ref, al_ref, be_ref, t_ref, sum_ref, min_ref, err_ref):
        c = pl.program_id(0)
        k = pl.program_id(1)

        @pl.when(k == 0)
        def _():
            sum_ref[...] = jnp.zeros_like(sum_ref)
            min_ref[...] = jnp.full_like(min_ref, jnp.inf)

        nllreg, eff, err = _elem_math(g_ref[...], nu_ref[...], al_ref[...],
                                      be_ref[...], t_ref[...])
        err_ref[...] = err.astype(err_ref.dtype)

        if need_mask:
            row0 = (c * tpc + k) * br
            partial = (row0 + br) * lanes > count   # covers partial AND clamped tiles

            @pl.when(partial)
            def _():
                valid = _valid_mask(row0, (br, lanes), count, lanes)
                sum_ref[...] += _fold(jnp.where(valid, nllreg, 0.0), jnp.add)
                min_ref[...] = jnp.minimum(
                    min_ref[...], _fold(jnp.where(valid, eff, jnp.inf), jnp.minimum))

            @pl.when(jnp.logical_not(partial))
            def _():
                sum_ref[...] += _fold(nllreg, jnp.add)
                min_ref[...] = jnp.minimum(min_ref[...], _fold(eff, jnp.minimum))
        else:
            sum_ref[...] += _fold(nllreg, jnp.add)
            min_ref[...] = jnp.minimum(min_ref[...], _fold(eff, jnp.minimum))

    return kernel


def _make_pass2_kernel(count, lanes, br, tpc, need_mask):
    # pass 2: reads only the bf16 err spill; mmse = min(sqrt(minb)*|err|, err^2).
    def kernel(sb_ref, err_ref, out_ref):
        c = pl.program_id(0)
        k = pl.program_id(1)

        @pl.when(k == 0)
        def _():
            out_ref[...] = jnp.zeros_like(out_ref)

        e = err_ref[...].astype(jnp.float32)
        sb = sb_ref[0, 0]
        m = jnp.minimum(sb * jnp.abs(e), e * e)

        if need_mask:
            row0 = (c * tpc + k) * br
            partial = (row0 + br) * lanes > count

            @pl.when(partial)
            def _():
                valid = _valid_mask(row0, (br, lanes), count, lanes)
                out_ref[...] += _fold(jnp.where(valid, m, 0.0), jnp.add)

            @pl.when(jnp.logical_not(partial))
            def _():
                out_ref[...] += _fold(m, jnp.add)
        else:
            out_ref[...] += _fold(m, jnp.add)

    return kernel


# --------------------------------------------------------------------------------------
# wrapper
# --------------------------------------------------------------------------------------
def _pad_flat(x, pad_value, padded_count):
    flat = jnp.asarray(x, jnp.float32).reshape(-1)
    extra = padded_count - flat.shape[0]
    if extra:
        flat = jnp.concatenate([flat, jnp.full((extra,), pad_value, jnp.float32)])
    return flat.reshape(padded_count // LANES, LANES)


def _to_2d(x, rows, lanes, pad, pad_value):
    x = jnp.asarray(x, jnp.float32)
    if pad:
        flat = x.reshape(-1)
        flat = jnp.concatenate([flat, jnp.full((pad,), pad_value, jnp.float32)])
        return flat.reshape(rows, lanes)
    return x.reshape(rows, lanes)


def evidential_loss(inputs, target, *, num_cores=None, path=None):
    """path in {None, 'fused', 'onepass', 'twopass'}; None = auto dispatch."""
    gamma, nu, alpha, beta = inputs
    shape = tuple(int(s) for s in gamma.shape)
    count = 1
    for s in shape:
        count *= s
    if count == 0:
        raise ValueError("empty input")

    if num_cores is None:
        num_cores = _num_tensorcores()

    tensors = (gamma, nu, alpha, beta, target)
    # padding values keep every intermediate finite; padded entries are masked out of
    # the nll/reg sums and the min-bound, and contribute exactly 0 to the mmse sum.
    pad_vals = (0.0, 1.0, 2.0, 1.0, 0.0)

    # ----- small-tensor fast path: one fused, fully resident kernel -----
    if path == 'fused' or (path is None and count <= FUSED_MAX_ELEMS):
        rows = -(-count // LANES)
        rows_p = -(-rows // SUBLANES) * SUBLANES
        padded = rows_p * LANES
        g, n, a, b, t = (_pad_flat(x, v, padded) for x, v in zip(tensors, pad_vals))
        full_spec = pl.BlockSpec((rows_p, LANES), lambda i: (0, 0))
        out = pl.pallas_call(
            _make_fused_kernel(count, padded),
            out_shape=jax.ShapeDtypeStruct((1, 1), jnp.float32),
            grid_spec=pltpu.PrefetchScalarGridSpec(
                num_scalar_prefetch=0,
                grid=(1,),
                in_specs=[full_spec] * 5,
                out_specs=pl.BlockSpec((1, 1), lambda i: (0, 0))),
            compiler_params=pltpu.CompilerParams(
                dimension_semantics=("arbitrary",)),
        )(g, n, a, b, t)
        return out[0, 0]

    # ----- shared 2-D shaping for the large paths (no granule rounding) -----
    if len(shape) >= 2 and shape[-1] % LANES == 0 and shape[-1] <= MAX_NATIVE_LANES:
        lanes, rows, pad = shape[-1], count // shape[-1], 0     # free collapse, no copy
    else:
        lanes = LANES
        rows = -(-count // LANES)
        pad = rows * LANES - count                              # <= 127 pad elements
    br = max(16, (BLOCK_ELEMS // lanes) // 16 * 16)
    if rows < br:                                               # forced path on a tiny tensor
        return evidential_loss(inputs, target, num_cores=num_cores, path='fused')
    num_tiles = -(-rows // br)
    g2, n2, a2, b2, t2 = (_to_2d(x, rows, lanes, pad, v)
                          for x, v in zip(tensors, pad_vals))

    if path == 'onepass' and count > ONE_PASS_MAX_ELEMS:
        path = 'twopass'
    use_onepass = (path == 'onepass') or (
        path is None and num_cores == 1 and count <= ONE_PASS_MAX_ELEMS)

    # ----- one-pass VMEM-resident-err path (reads each tensor exactly once) -----
    if use_onepass:
        need_mask = num_tiles * br * lanes != count
        out = pl.pallas_call(
            _make_onepass_kernel(count, lanes, br, num_tiles, need_mask),
            out_shape=jax.ShapeDtypeStruct((SUBLANES, lanes), jnp.float32),
            grid_spec=pltpu.PrefetchScalarGridSpec(
                num_scalar_prefetch=0,
                grid=(num_tiles,),
                in_specs=[pl.BlockSpec((br, lanes), lambda k: (k, 0))] * 5,
                out_specs=pl.BlockSpec((SUBLANES, lanes), lambda k: (0, 0)),
                scratch_shapes=[pltpu.VMEM((SUBLANES, lanes), jnp.float32),
                                pltpu.VMEM((num_tiles, br, lanes), jnp.float32)]),
            compiler_params=pltpu.CompilerParams(
                dimension_semantics=("arbitrary",),
                vmem_limit_bytes=ONE_PASS_VMEM_LIMIT),
        )(g2, n2, a2, b2, t2)
        return jnp.sum(out) / count

    # ----- two-pass path (v7x megacore split / very large tensors) -----
    tpc = -(-num_tiles // num_cores)
    need_mask = num_cores * tpc * br * lanes != count
    last = num_tiles - 1

    def in_map(c, k):
        # clamp so overflow tiles of the second core never DMA out of bounds;
        # their contribution is zeroed by the in-kernel mask.
        return (jnp.minimum(c * tpc + k, last), 0)

    in_spec = pl.BlockSpec((br, lanes), in_map)
    acc_spec = pl.BlockSpec((SUBLANES, lanes), lambda c, k: (c, 0))
    acc_shape = jax.ShapeDtypeStruct((num_cores * SUBLANES, lanes), jnp.float32)
    err_shape = jax.ShapeDtypeStruct((rows, lanes), jnp.bfloat16)
    params = pltpu.CompilerParams(dimension_semantics=("parallel", "arbitrary"))

    sums, mins, err16 = pl.pallas_call(
        _make_pass1_kernel(count, lanes, br, tpc, need_mask),
        out_shape=(acc_shape, acc_shape, err_shape),
        grid_spec=pltpu.PrefetchScalarGridSpec(
            num_scalar_prefetch=0,
            grid=(num_cores, tpc),
            in_specs=[in_spec] * 5,
            out_specs=(acc_spec, acc_spec, pl.BlockSpec((br, lanes), in_map))),
        compiler_params=params,
    )(g2, n2, a2, b2, t2)

    nllreg_sum = jnp.sum(sums)
    sqrt_minb = jnp.sqrt(jnp.min(mins)).reshape(1, 1)

    mmse_parts = pl.pallas_call(
        _make_pass2_kernel(count, lanes, br, tpc, need_mask),
        out_shape=acc_shape,
        grid_spec=pltpu.PrefetchScalarGridSpec(
            num_scalar_prefetch=0,
            grid=(num_cores, tpc),
            in_specs=[pl.BlockSpec(memory_space=pltpu.MemorySpace.SMEM),
                      pl.BlockSpec((br, lanes), in_map)],
            out_specs=acc_spec),
        compiler_params=params,
    )(sqrt_minb, err16)

    return (nllreg_sum + jnp.sum(mmse_parts)) / count


# --------------------------------------------------------------------------------------
# pure-JAX reference (correctness check)
# --------------------------------------------------------------------------------------
def reference_loss(gamma, nu, alpha, beta, target):
    g, n, a, b, y = (jnp.asarray(x, jnp.float32).reshape(-1)
                     for x in (gamma, nu, alpha, beta, target))
    err = y - g
    omega = 2.0 * b * (1.0 + n)
    nll = (0.5 * jnp.log(jnp.pi / n) - a * jnp.log(omega)
           + (a + 0.5) * jnp.log(n * err ** 2 + omega)
           + jsp.gammaln(a) - jsp.gammaln(a + 0.5))
    reg = jnp.abs(err) * (2.0 * n + a) * REG_FACTOR
    alpha_eff = (jnp.exp(jsp.digamma(a + 0.5) - jsp.digamma(a)) - 1.0) \
        * 2.0 * b * (1.0 + n) / (n + EPS)
    nu_eff = b * (1.0 + n) / ((n + EPS) * a)
    min_bound = jnp.min(jnp.minimum(alpha_eff, nu_eff))
    c = jnp.clip(jnp.sqrt(min_bound) / jnp.abs(err), 0.0, 1.0)
    mmse = err ** 2 * c
    return jnp.mean(nll) + jnp.mean(reg) + jnp.mean(mmse)


def _make_inputs(key, shape):
    k1, k2, k3, k4, k5 = jax.random.split(key, 5)
    gamma = jax.random.normal(k1, shape, jnp.float32)
    nu = jax.nn.softplus(jax.random.normal(k2, shape, jnp.float32)) + 1e-2
    alpha = jax.nn.softplus(jax.random.normal(k3, shape, jnp.float32)) + 1.0
    beta = jax.nn.softplus(jax.random.normal(k4, shape, jnp.float32)) + 1e-2
    target = jax.random.normal(k5, shape, jnp.float32)
    return gamma, nu, alpha, beta, target


if __name__ == "__main__":
    key = jax.random.PRNGKey(0)
    cases = [
        ((2, 4, 16, 16), None),        # fused path, lane aligned        (2048 elems)
        ((3, 5, 41), None),            # fused path, pad + mask          (615 elems)
        ((2, 4, 256, 256), None),      # auto large path, native lanes   (524288 elems)
        ((2, 4, 256, 256), 'onepass'), # force VMEM-resident-err path
        ((2, 4, 256, 256), 'twopass'), # force bf16-err-spill path
        ((2, 3, 229, 101), None),      # auto large path, pad + mask     (138774 elems)
        ((2, 3, 229, 101), 'onepass'),
        ((2, 3, 229, 101), 'twopass'),
    ]
    for shape, path in cases:
        key, sub = jax.random.split(key)
        gamma, nu, alpha, beta, target = _make_inputs(sub, shape)
        loss = jax.block_until_ready(
            evidential_loss((gamma, nu, alpha, beta), target, path=path))
        ref = jax.block_until_ready(
            reference_loss(gamma, nu, alpha, beta, target))
        assert bool(jnp.isfinite(loss)), f"loss not finite for {shape} ({path})"
        assert abs(float(loss) - float(ref)) <= 1e-2 + 1e-2 * abs(float(ref)), (
            shape, path, float(loss), float(ref))
    print("KERNEL_OK")
</pallas_src>

<mosaic_0001>
module attributes {stable_mosaic.version = 11 : i64} {
  func.func @kernel(%arg0: i32, %arg1: memref<16x128xf32, #tpu.memory_space<vmem>>, %arg2: memref<16x128xf32, #tpu.memory_space<vmem>>, %arg3: memref<16x128xf32, #tpu.memory_space<vmem>>, %arg4: memref<16x128xf32, #tpu.memory_space<vmem>>, %arg5: memref<16x128xf32, #tpu.memory_space<vmem>>, %arg6: memref<1x1xf32, #tpu.memory_space<vmem>>) attributes {dimension_semantics = [#tpu.dimension_semantics<arbitrary>], iteration_bounds = array<i64: 1>, scalar_prefetch = 0 : i64, scratch_operands = 0 : i64, tpu.core_type = #tpu.core_type<tc>, window_params = [{pipeline_mode = #tpu.pipeline_mode<synchronous>, transform_indices = @transform_0, window_bounds = array<i64: 16, 128>}, {pipeline_mode = #tpu.pipeline_mode<synchronous>, transform_indices = @transform_1, window_bounds = array<i64: 16, 128>}, {pipeline_mode = #tpu.pipeline_mode<synchronous>, transform_indices = @transform_2, window_bounds = array<i64: 16, 128>}, {pipeline_mode = #tpu.pipeline_mode<synchronous>, transform_indices = @transform_3, window_bounds = array<i64: 16, 128>}, {pipeline_mode = #tpu.pipeline_mode<synchronous>, transform_indices = @transform_4, window_bounds = array<i64: 16, 128>}, {pipeline_mode = #tpu.pipeline_mode<synchronous>, transform_indices = @transform_5, window_bounds = array<i64: 1, 1>}]} {
    %c0 = arith.constant 0 : index
    %c0_0 = arith.constant 0 : index
    %0 = vector.load %arg1[%c0, %c0_0] : memref<16x128xf32, #tpu.memory_space<vmem>>, vector<16x128xf32>
    %c0_1 = arith.constant 0 : index
    %c0_2 = arith.constant 0 : index
    %1 = vector.load %arg2[%c0_1, %c0_2] : memref<16x128xf32, #tpu.memory_space<vmem>>, vector<16x128xf32>
    %c0_3 = arith.constant 0 : index
    %c0_4 = arith.constant 0 : index
    %2 = vector.load %arg3[%c0_3, %c0_4] : memref<16x128xf32, #tpu.memory_space<vmem>>, vector<16x128xf32>
    %c0_5 = arith.constant 0 : index
    %c0_6 = arith.constant 0 : index
    %3 = vector.load %arg4[%c0_5, %c0_6] : memref<16x128xf32, #tpu.memory_space<vmem>>, vector<16x128xf32>
    %c0_7 = arith.constant 0 : index
    %c0_8 = arith.constant 0 : index
    %4 = vector.load %arg5[%c0_7, %c0_8] : memref<16x128xf32, #tpu.memory_space<vmem>>, vector<16x128xf32>
    %5 = arith.subf %4, %0 : vector<16x128xf32>
    %6 = arith.mulf %5, %5 : vector<16x128xf32>
    %cst = arith.constant 1.000000e+00 : f32
    %7 = vector.broadcast %cst : f32 to vector<16x128xf32>
    %8 = arith.addf %7, %1 : vector<16x128xf32>
    %cst_9 = arith.constant 2.000000e+00 : f32
    %9 = vector.broadcast %cst_9 : f32 to vector<16x128xf32>
    %10 = arith.mulf %9, %3 : vector<16x128xf32>
    %11 = arith.mulf %10, %8 : vector<16x128xf32>
    %cst_10 = arith.constant 3.000000e+00 : f32
    %12 = vector.broadcast %cst_10 : f32 to vector<16x128xf32>
    %13 = arith.addf %2, %12 : vector<16x128xf32>
    %14 = tpu.reciprocal %13 {approx = true} : vector<16x128xf32> -> vector<16x128xf32>
    %15 = arith.mulf %14, %14 : vector<16x128xf32>
    %cst_11 = arith.constant 1.000000e+00 : f32
    %16 = vector.broadcast %cst_11 : f32 to vector<16x128xf32>
    %17 = arith.addf %2, %16 : vector<16x128xf32>
    %18 = arith.mulf %2, %17 : vector<16x128xf32>
    %cst_12 = arith.constant 2.000000e+00 : f32
    %19 = vector.broadcast %cst_12 : f32 to vector<16x128xf32>
    %20 = arith.addf %2, %19 : vector<16x128xf32>
    %21 = arith.mulf %18, %20 : vector<16x128xf32>
    %cst_13 = arith.constant 5.000000e-01 : f32
    %22 = vector.broadcast %cst_13 : f32 to vector<16x128xf32>
    %23 = arith.addf %2, %22 : vector<16x128xf32>
    %cst_14 = arith.constant 1.500000e+00 : f32
    %24 = vector.broadcast %cst_14 : f32 to vector<16x128xf32>
    %25 = arith.addf %2, %24 : vector<16x128xf32>
    %26 = arith.mulf %23, %25 : vector<16x128xf32>
    %cst_15 = arith.constant 2.500000e+00 : f32
    %27 = vector.broadcast %cst_15 : f32 to vector<16x128xf32>
    %28 = arith.addf %2, %27 : vector<16x128xf32>
    %29 = arith.mulf %26, %28 : vector<16x128xf32>
    %30 = arith.mulf %21, %29 : vector<16x128xf32>
    %31 = tpu.reciprocal %30 {approx = true} : vector<16x128xf32> -> vector<16x128xf32>
    %32 = arith.mulf %31, %29 : vector<16x128xf32>
    %cst_16 = arith.constant 1.562500e-03 : f32
    %33 = vector.broadcast %cst_16 : f32 to vector<16x128xf32>
    %34 = arith.mulf %15, %33 : vector<16x128xf32>
    %cst_17 = arith.constant -0.00520833349 : f32
    %35 = vector.broadcast %cst_17 : f32 to vector<16x128xf32>
    %36 = arith.addf %35, %34 : vector<16x128xf32>
    %37 = arith.mulf %15, %36 : vector<16x128xf32>
    %cst_18 = arith.constant 1.250000e-01 : f32
    %38 = vector.broadcast %cst_18 : f32 to vector<16x128xf32>
    %39 = arith.addf %38, %37 : vector<16x128xf32>
    %40 = arith.mulf %14, %39 : vector<16x128xf32>
    %41 = arith.mulf %1, %13 : vector<16x128xf32>
    %42 = math.log %41 : vector<16x128xf32>
    %cst_19 = arith.constant 5.000000e-01 : f32
    %43 = vector.broadcast %cst_19 : f32 to vector<16x128xf32>
    %44 = arith.mulf %43, %42 : vector<16x128xf32>
    %cst_20 = arith.constant 0.572364926 : f32
    %45 = vector.broadcast %cst_20 : f32 to vector<16x128xf32>
    %46 = arith.subf %45, %44 : vector<16x128xf32>
    %47 = math.log %11 : vector<16x128xf32>
    %48 = arith.mulf %2, %47 : vector<16x128xf32>
    %49 = arith.subf %46, %48 : vector<16x128xf32>
    %cst_21 = arith.constant 5.000000e-01 : f32
    %50 = vector.broadcast %cst_21 : f32 to vector<16x128xf32>
    %51 = arith.addf %2, %50 : vector<16x128xf32>
    %52 = arith.mulf %1, %6 : vector<16x128xf32>
    %53 = arith.addf %52, %11 : vector<16x128xf32>
    %54 = math.log %53 : vector<16x128xf32>
    %55 = arith.mulf %51, %54 : vector<16x128xf32>
    %56 = arith.addf %49, %55 : vector<16x128xf32>
    %57 = arith.mulf %29, %32 : vector<16x128xf32>
    %58 = math.log %57 : vector<16x128xf32>
    %59 = arith.addf %56, %58 : vector<16x128xf32>
    %60 = arith.addf %59, %40 : vector<16x128xf32>
    %61 = math.absf %5 : vector<16x128xf32>
    %cst_22 = arith.constant 2.000000e+00 : f32
    %62 = vector.broadcast %cst_22 : f32 to vector<16x128xf32>
    %63 = arith.mulf %62, %1 : vector<16x128xf32>
    %64 = arith.addf %63, %2 : vector<16x128xf32>
    %65 = arith.mulf %61, %64 : vector<16x128xf32>
    %cst_23 = arith.constant 1.000000e-01 : f32
    %66 = vector.broadcast %cst_23 : f32 to vector<16x128xf32>
    %67 = arith.mulf %65, %66 : vector<16x128xf32>
    %68 = arith.addf %60, %67 : vector<16x128xf32>
    %cst_24 = arith.constant 5.000000e-01 : f32
    %69 = vector.broadcast %cst_24 : f32 to vector<16x128xf32>
    %70 = arith.addf %2, %69 : vector<16x128xf32>
    %71 = arith.mulf %2, %70 : vector<16x128xf32>
    %cst_25 = arith.constant 1.000000e+00 : f32
    %72 = vector.broadcast %cst_25 : f32 to vector<16x128xf32>
    %73 = arith.addf %2, %72 : vector<16x128xf32>
    %cst_26 = arith.constant 1.500000e+00 : f32
    %74 = vector.broadcast %cst_26 : f32 to vector<16x128xf32>
    %75 = arith.addf %2, %74 : vector<16x128xf32>
    %76 = arith.mulf %73, %75 : vector<16x128xf32>
    %cst_27 = arith.constant 2.000000e+00 : f32
    %77 = vector.broadcast %cst_27 : f32 to vector<16x128xf32>
    %78 = arith.addf %2, %77 : vector<16x128xf32>
    %cst_28 = arith.constant 2.500000e+00 : f32
    %79 = vector.broadcast %cst_28 : f32 to vector<16x128xf32>
    %80 = arith.addf %2, %79 : vector<16x128xf32>
    %81 = arith.mulf %78, %80 : vector<16x128xf32>
    %82 = arith.mulf %76, %81 : vector<16x128xf32>
    %83 = arith.mulf %71, %81 : vector<16x128xf32>
    %84 = arith.addf %82, %83 : vector<16x128xf32>
    %85 = arith.mulf %71, %76 : vector<16x128xf32>
    %86 = arith.addf %84, %85 : vector<16x128xf32>
    %cst_29 = arith.constant 5.000000e-01 : f32
    %87 = vector.broadcast %cst_29 : f32 to vector<16x128xf32>
    %88 = arith.mulf %87, %86 : vector<16x128xf32>
    %89 = arith.mulf %88, %31 : vector<16x128xf32>
    %cst_30 = arith.constant 1.562500e-02 : f32
    %90 = vector.broadcast %cst_30 : f32 to vector<16x128xf32>
    %91 = arith.mulf %15, %90 : vector<16x128xf32>
    %cst_31 = arith.constant 1.250000e-01 : f32
    %92 = vector.broadcast %cst_31 : f32 to vector<16x128xf32>
    %93 = arith.subf %92, %91 : vector<16x128xf32>
    %94 = arith.mulf %14, %93 : vector<16x128xf32>
    %cst_32 = arith.constant 5.000000e-01 : f32
    %95 = vector.broadcast %cst_32 : f32 to vector<16x128xf32>
    %96 = arith.addf %95, %94 : vector<16x128xf32>
    %97 = arith.mulf %14, %96 : vector<16x128xf32>
    %98 = arith.addf %97, %89 : vector<16x128xf32>
    %cst_33 = arith.constant 9.99999993E-9 : f32
    %99 = vector.broadcast %cst_33 : f32 to vector<16x128xf32>
    %100 = arith.addf %1, %99 : vector<16x128xf32>
    %101 = arith.mulf %100, %2 : vector<16x128xf32>
    %102 = tpu.reciprocal %101 {approx = true} : vector<16x128xf32> -> vector<16x128xf32>
    %103 = arith.mulf %3, %8 : vector<16x128xf32>
    %104 = arith.mulf %102, %103 : vector<16x128xf32>
    %105 = arith.mulf %104, %2 : vector<16x128xf32>
    %106 = math.exp %98 : vector<16x128xf32>
    %cst_34 = arith.constant 1.000000e+00 : f32
    %107 = vector.broadcast %cst_34 : f32 to vector<16x128xf32>
    %108 = arith.subf %106, %107 : vector<16x128xf32>
    %cst_35 = arith.constant 2.000000e+00 : f32
    %109 = vector.broadcast %cst_35 : f32 to vector<16x128xf32>
    %110 = arith.mulf %108, %109 : vector<16x128xf32>
    %111 = arith.mulf %110, %105 : vector<16x128xf32>
    %112 = arith.minimumf %111, %104 : vector<16x128xf32>
    %cst_36 = arith.constant dense<0x7F800000> : vector<16xf32>
    %113 = vector.multi_reduction <minimumf>, %112, %cst_36 [1] : vector<16x128xf32> to vector<16xf32>
    %114 = vector.shape_cast %113 : vector<16xf32> to vector<16x1xf32>
    %cst_37 = arith.constant dense<0x7F800000> : vector<1xf32>
    %115 = vector.multi_reduction <minimumf>, %114, %cst_37 [0] : vector<16x1xf32> to vector<1xf32>
    %116 = vector.shape_cast %115 : vector<1xf32> to vector<1x1xf32>
    %117 = math.sqrt %116 : vector<1x1xf32>
    %118 = math.absf %5 : vector<16x128xf32>
    %119 = vector.broadcast %117 : vector<1x1xf32> to vector<16x128xf32>
    %120 = arith.mulf %119, %118 : vector<16x128xf32>
    %121 = arith.mulf %5, %5 : vector<16x128xf32>
    %122 = arith.minimumf %120, %121 : vector<16x128xf32>
    %123 = arith.addf %68, %122 : vector<16x128xf32>
    %cst_38 = arith.constant dense<0.000000e+00> : vector<16xf32>
    %124 = vector.multi_reduction <add>, %123, %cst_38 [1] : vector<16x128xf32> to vector<16xf32>
    %125 = vector.shape_cast %124 : vector<16xf32> to vector<16x1xf32>
    %cst_39 = arith.constant dense<0.000000e+00> : vector<1xf32>
    %126 = vector.multi_reduction <add>, %125, %cst_39 [0] : vector<16x1xf32> to vector<1xf32>
    %127 = vector.shape_cast %126 : vector<1xf32> to vector<1x1xf32>
    %cst_40 = arith.constant 4.8828125E-4 : f32
    %128 = vector.broadcast %cst_40 : f32 to vector<1x1xf32>
    %129 = arith.mulf %127, %128 : vector<1x1xf32>
    %c0_41 = arith.constant 0 : index
    %c0_42 = arith.constant 0 : index
    %130 = vector.load %arg6[%c0_41, %c0_42] : memref<1x1xf32, #tpu.memory_space<vmem>>, vector<1x1xf32>
    tpu.vector_store %arg6[%c0_41, %c0_42], %129 {strides = array<i32>} : memref<1x1xf32, #tpu.memory_space<vmem>>, vector<1x1xf32>,
    return
  }
  func.func @transform_0(%arg0: i32) -> (i32, i32) {
    %c0_i32 = arith.constant 0 : i32
    %c0_i32_0 = arith.constant 0 : i32
    %c0_i32_1 = arith.constant 0 : i32
    return %c0_i32, %c0_i32_0 : i32, i32
  }
  func.func @transform_1(%arg0: i32) -> (i32, i32) {
    %c0_i32 = arith.constant 0 : i32
    %c0_i32_0 = arith.constant 0 : i32
    %c0_i32_1 = arith.constant 0 : i32
    return %c0_i32, %c0_i32_0 : i32, i32
  }
  func.func @transform_2(%arg0: i32) -> (i32, i32) {
    %c0_i32 = arith.constant 0 : i32
    %c0_i32_0 = arith.constant 0 : i32
    %c0_i32_1 = arith.constant 0 : i32
    return %c0_i32, %c0_i32_0 : i32, i32
  }
  func.func @transform_3(%arg0: i32) -> (i32, i32) {
    %c0_i32 = arith.constant 0 : i32
    %c0_i32_0 = arith.constant 0 : i32
    %c0_i32_1 = arith.constant 0 : i32
    return %c0_i32, %c0_i32_0 : i32, i32
  }
  func.func @transform_4(%arg0: i32) -> (i32, i32) {
    %c0_i32 = arith.constant 0 : i32
    %c0_i32_0 = arith.constant 0 : i32
    %c0_i32_1 = arith.constant 0 : i32
    return %c0_i32, %c0_i32_0 : i32, i32
  }
  func.func @transform_5(%arg0: i32) -> (i32, i32) {
    %c0_i32 = arith.constant 0 : i32
    %c0_i32_0 = arith.constant 0 : i32
    %c0_i32_1 = arith.constant 0 : i32
    return %c0_i32, %c0_i32_0 : i32, i32
  }
}

</mosaic_0001>

<llo_original>
// kernel: tpu_custom_call.1
$region0: #{tpu_custom_call.1}
  #allocation0 [shape = 'u32[]', space=smem, size = 0x4, offset = 0x4, fixed_abs, tag = 'smem constant byte address 0x4 - core index']
  #allocation1 [shape = 'u32[144,128]{1,0:T(1,128)}', space=vmem, size = 0x12000, scoped, tag = 'internal scratch']
  %s0 = inlined_call_operand.hbm [shape: f32[16,128], index: 0, kind: input, shape index: {}]
  %s1 = inlined_call_operand.hbm [shape: f32[16,128], index: 1, kind: input, shape index: {}]
  %s2 = inlined_call_operand.hbm [shape: f32[16,128], index: 2, kind: input, shape index: {}]
  %s3 = inlined_call_operand.hbm [shape: f32[16,128], index: 3, kind: input, shape index: {}]
  %s4 = inlined_call_operand.hbm [shape: f32[16,128], index: 4, kind: input, shape index: {}]
  %s5 = inlined_call_operand.hbm [shape: f32[1,1], index: 5, kind: output, shape index: {}]
  %s6 = sld [smem:[#allocation0]]
  $region50: #{tpu_custom_call.1} parent=0
    _
  %s8 = ssub.s32 1, %s6
  %s9 = scalar_select 0, %s8, %s6
  $region1: #{tpu_custom_call.1} parent=0
    #allocation2 [shape = 'u8[8192]{0}', space=vmem, size = 0x2000, scoped, tag = 'input window, operand 0, single buffered']
    #allocation3 [shape = 's32[1]{0}', space=sflag, size = 0x4, scoped, tag = 'scoped memory for tpu_custom_call.1']
    #allocation4 [shape = 's32[1]{0}', space=sflag, size = 0x4, scoped, tag = 'scoped memory for tpu_custom_call.1']
    #allocation5 [shape = 'u8[8192]{0}', space=vmem, size = 0x2000, scoped, tag = 'input window, operand 1, single buffered']
    #allocation6 [shape = 's32[1]{0}', space=sflag, size = 0x4, scoped, tag = 'scoped memory for tpu_custom_call.1']
    #allocation7 [shape = 'u8[8192]{0}', space=vmem, size = 0x2000, scoped, tag = 'input window, operand 2, single buffered']
    #allocation8 [shape = 'u8[8192]{0}', space=vmem, size = 0x2000, scoped, tag = 'input window, operand 3, single buffered']
    #allocation9 [shape = 's32[1]{0}', space=sflag, size = 0x4, scoped, tag = 'scoped memory for tpu_custom_call.1']
    #allocation10 [shape = 'u8[8192]{0}', space=vmem, size = 0x2000, scoped, tag = 'input window, operand 4, single buffered']
    #allocation11 [shape = 'u8[512]{0}', space=vmem, size = 0x400, scoped, tag = 'output window, operand 0, single buffered']
    %10 = vsyncpa [#allocation3], 0
    %11 = vsyncpa [#allocation6], 0
    %12 = vsyncpa [#allocation9], 0
    %13 = vsyncpa [#allocation4], 0
    // Predicated region
    $region2: #{tpu_custom_call.1} parent=1 // pred_check
      _
    $region3: #{tpu_custom_call.1} parent=1 // pred_check_branch
      %15 = sbr.rel (0) target = $region5
    $region4: #{tpu_custom_call.1} parent=1 // pred_region
      %s17 = ssub.s32 256, 256
      %18 = vsyncadd [#allocation3], %s17
      %s19 = sshll.u32 [#allocation2], 4
      %s20 = int_to_ptr.vmem [resolvable:$true] %s19
      %25 = dma.hbm_to_vmem [thread:$0]  %s0, 256, %s20, [#allocation3], 128, 128, 8
    $region5: #{tpu_custom_call.1} parent=1 // pred_fallthru
      _
    // Predicated region
    $region6: #{tpu_custom_call.1} parent=1 // pred_check
      _
    $region7: #{tpu_custom_call.1} parent=1 // pred_check_branch
      %27 = sbr.rel (0) target = $region9
    $region8: #{tpu_custom_call.1} parent=1 // pred_region
      %s29 = ssub.s32 256, 256
      %30 = vsyncadd [#allocation6], %s29
      %s31 = sshll.u32 [#allocation5], 4
      %s32 = int_to_ptr.vmem [resolvable:$true] %s31
      %37 = dma.hbm_to_vmem [thread:$0]  %s1, 256, %s32, [#allocation6], 128, 128, 8
    $region9: #{tpu_custom_call.1} parent=1 // pred_fallthru
      _
    // Predicated region
    $region10: #{tpu_custom_call.1} parent=1 // pred_check
      _
    $region11: #{tpu_custom_call.1} parent=1 // pred_check_branch
      %39 = sbr.rel (0) target = $region13
    $region12: #{tpu_custom_call.1} parent=1 // pred_region
      %s41 = ssub.s32 256, 256
      %42 = vsyncadd [#allocation6], %s41
      %s43 = sshll.u32 [#allocation7], 4
      %s44 = int_to_ptr.vmem [resolvable:$true] %s43
      %49 = dma.hbm_to_vmem [thread:$0]  %s2, 256, %s44, [#allocation6], 128, 128, 8
    $region13: #{tpu_custom_call.1} parent=1 // pred_fallthru
      _
    // Predicated region
    $region14: #{tpu_custom_call.1} parent=1 // pred_check
      _
    $region15: #{tpu_custom_call.1} parent=1 // pred_check_branch
      %51 = sbr.rel (0) target = $region17
    $region16: #{tpu_custom_call.1} parent=1 // pred_region
      %s53 = ssub.s32 256, 256
      %54 = vsyncadd [#allocation9], %s53
      %s55 = sshll.u32 [#allocation8], 4
      %s56 = int_to_ptr.vmem [resolvable:$true] %s55
      %61 = dma.hbm_to_vmem [thread:$0]  %s3, 256, %s56, [#allocation9], 128, 128, 8
    $region17: #{tpu_custom_call.1} parent=1 // pred_fallthru
      _
    // Predicated region
    $region18: #{tpu_custom_call.1} parent=1 // pred_check
      _
    $region19: #{tpu_custom_call.1} parent=1 // pred_check_branch
      %63 = sbr.rel (0) target = $region21
    $region20: #{tpu_custom_call.1} parent=1 // pred_region
      %s65 = ssub.s32 256, 256
      %66 = vsyncadd [#allocation9], %s65
      %s67 = sshll.u32 [#allocation10], 4
      %s68 = int_to_ptr.vmem [resolvable:$true] %s67
      %73 = dma.hbm_to_vmem [thread:$0]  %s4, 256, %s68, [#allocation9], 128, 128, 8
    $region21: #{tpu_custom_call.1} parent=1 // pred_fallthru
      _
    // Predicated region
    $region22: #{tpu_custom_call.1} parent=1 // pred_check
      _
    $region23: #{tpu_custom_call.1} parent=1 // pred_check_branch
      %75 = sbr.rel (0) target = $region25
    $region24: #{tpu_custom_call.1} parent=1 // pred_region
      %76 = dma.done [#allocation3], 256
    $region25: #{tpu_custom_call.1} parent=1 // pred_fallthru
      _
    // Predicated region
    $region26: #{tpu_custom_call.1} parent=1 // pred_check
      _
    $region27: #{tpu_custom_call.1} parent=1 // pred_check_branch
      %78 = sbr.rel (0) target = $region29
    $region28: #{tpu_custom_call.1} parent=1 // pred_region
      %79 = dma.done [#allocation6], 256
    $region29: #{tpu_custom_call.1} parent=1 // pred_fallthru
      _
    // Predicated region
    $region30: #{tpu_custom_call.1} parent=1 // pred_check
      _
    $region31: #{tpu_custom_call.1} parent=1 // pred_check_branch
      %81 = sbr.rel (0) target = $region33
    $region32: #{tpu_custom_call.1} parent=1 // pred_region
      %82 = dma.done [#allocation6], 256
    $region33: #{tpu_custom_call.1} parent=1 // pred_fallthru
      _
    // Predicated region
    $region34: #{tpu_custom_call.1} parent=1 // pred_check
      _
    $region35: #{tpu_custom_call.1} parent=1 // pred_check_branch
      %84 = sbr.rel (0) target = $region37
    $region36: #{tpu_custom_call.1} parent=1 // pred_region
      %85 = dma.done [#allocation9], 256
    $region37: #{tpu_custom_call.1} parent=1 // pred_fallthru
      _
    // Predicated region
    $region38: #{tpu_custom_call.1} parent=1 // pred_check
      _
    $region39: #{tpu_custom_call.1} parent=1 // pred_check_branch
      %87 = sbr.rel (0) target = $region41
    $region40: #{tpu_custom_call.1} parent=1 // pred_region
      %88 = dma.done [#allocation9], 256
    $region41: #{tpu_custom_call.1} parent=1 // pred_fallthru
      _
    %v89 = vld [vmem:[#allocation2] sm:$0xff]
    %v90 = vld [vmem:[#allocation2 + $0x8] sm:$0xff]
    %v91 = vld [vmem:[#allocation5] sm:$0xff]
    %v92 = vld [vmem:[#allocation5 + $0x8] sm:$0xff]
    %v93 = vld [vmem:[#allocation7] sm:$0xff]
    %v94 = vld [vmem:[#allocation7 + $0x8] sm:$0xff]
    %v95 = vld [vmem:[#allocation8] sm:$0xff]
    %v96 = vld [vmem:[#allocation8 + $0x8] sm:$0xff]
    %v97 = vld [vmem:[#allocation10] sm:$0xff]
    %v98 = vld [vmem:[#allocation10 + $0x8] sm:$0xff]
    %v99 = vsub.f32 %v97, %v89
    %v100 = vsub.f32 %v98, %v90
    %v101 = vmul.f32 %v99, %v99
    %v102 = vmul.f32 %v100, %v100
    %v103 = vadd.f32 %v91, 1.0
    %v104 = vadd.f32 %v92, 1.0
    %v105 = vmul.f32 %v95, 2.0
    %v106 = vmul.f32 %v96, 2.0
    %v107 = vmul.f32 %v105, %v103
    %v108 = vmul.f32 %v106, %v104
    %v109 = vadd.f32 %v93, 3.0
    %v110 = vadd.f32 %v94, 3.0
    %v111 = vrcp.pop %v109
    %v112 = vrcp.pop %v110
    %v113 = vmul.f32 %v111, %v111
    %v114 = vmul.f32 %v112, %v112
    %v115 = vadd.f32 %v93, 1.0
    %v116 = vadd.f32 %v94, 1.0
    %v117 = vmul.f32 %v93, %v115
    %v118 = vmul.f32 %v94, %v116
    %v119 = vadd.f32 %v93, 2.0
    %v120 = vadd.f32 %v94, 2.0
    %v121 = vmul.f32 %v117, %v119
    %v122 = vmul.f32 %v118, %v120
    %v123 = vadd.f32 %v93, 0.5
    %v124 = vadd.f32 %v94, 0.5
    %v125 = vadd.f32 %v93, 1.5
    %v126 = vadd.f32 %v94, 1.5
    %v127 = vmul.f32 %v123, %v125
    %v128 = vmul.f32 %v124, %v126
    %v129 = vadd.f32 %v93, 2.5
    %v130 = vadd.f32 %v94, 2.5
    %v131 = vmul.f32 %v127, %v129
    %v132 = vmul.f32 %v128, %v130
    %v133 = vmul.f32 %v121, %v131
    %v134 = vmul.f32 %v122, %v132
    %v135 = vrcp.pop %v133
    %v136 = vrcp.pop %v134
    %v137 = vmul.f32 %v135, %v131
    %v138 = vmul.f32 %v136, %v132
    %v139 = vmul.f32 %v113, 0.0015625
    %v140 = vmul.f32 %v114, 0.0015625
    %v141 = vadd.f32 %v139, -0.0052083335
    %v142 = vadd.f32 %v140, -0.0052083335
    %v143 = vmul.f32 %v113, %v141
    %v144 = vmul.f32 %v114, %v142
    %v145 = vadd.f32 %v143, 0.125
    %v146 = vadd.f32 %v144, 0.125
    %v147 = vmul.f32 %v111, %v145
    %v148 = vmul.f32 %v112, %v146
    %v149 = vmul.f32 %v91, %v109
    %v150 = vmul.f32 %v92, %v110
    %v151 = vlog2.pop %v149
    %v152 = vmul.f32 %v151, 0.6931472
    %v153 = vlog2.pop %v150
    %v154 = vmul.f32 %v153, 0.6931472
    %v155 = vmul.f32 %v152, 0.5
    %v156 = vmul.f32 %v154, 0.5
    %v157 = vsub.f32 0.5723649, %v155
    %v158 = vsub.f32 0.5723649, %v156
    %v159 = vlog2.pop %v107
    %v160 = vmul.f32 %v159, 0.6931472
    %v161 = vlog2.pop %v108
    %v162 = vmul.f32 %v161, 0.6931472
    %v163 = vmul.f32 %v93, %v160
    %v164 = vmul.f32 %v94, %v162
    %v165 = vsub.f32 %v157, %v163
    %v166 = vsub.f32 %v158, %v164
    %v167 = vmul.f32 %v91, %v101
    %v168 = vmul.f32 %v92, %v102
    %v169 = vadd.f32 %v167, %v107
    %v170 = vadd.f32 %v168, %v108
    %v171 = vlog2.pop %v169
    %v172 = vmul.f32 %v171, 0.6931472
    %v173 = vlog2.pop %v170
    %v174 = vmul.f32 %v173, 0.6931472
    %v175 = vmul.f32 %v123, %v172
    %v176 = vmul.f32 %v124, %v174
    %v177 = vadd.f32 %v165, %v175
    %v178 = vadd.f32 %v166, %v176
    %v179 = vmul.f32 %v131, %v137
    %v180 = vmul.f32 %v132, %v138
    %v181 = vlog2.pop %v179
    %v182 = vmul.f32 %v181, 0.6931472
    %v183 = vlog2.pop %v180
    %v184 = vmul.f32 %v183, 0.6931472
    %v185 = vadd.f32 %v177, %v182
    %v186 = vadd.f32 %v178, %v184
    %v187 = vadd.f32 %v185, %v147
    %v188 = vadd.f32 %v186, %v148
    %v189 = vand.u32 2147483647, %v99
    %v190 = vand.u32 2147483647, %v100
    %v191 = vmul.f32 %v91, 2.0
    %v192 = vmul.f32 %v92, 2.0
    %v193 = vadd.f32 %v191, %v93
    %v194 = vadd.f32 %v192, %v94
    %v195 = vmul.f32 %v189, %v193
    %v196 = vmul.f32 %v190, %v194
    %v197 = vmul.f32 %v195, 0.1
    %v198 = vmul.f32 %v196, 0.1
    %v199 = vadd.f32 %v187, %v197
    %v200 = vadd.f32 %v188, %v198
    %v201 = vmul.f32 %v93, %v123
    %v202 = vmul.f32 %v94, %v124
    %v203 = vmul.f32 %v115, %v125
    %v204 = vmul.f32 %v116, %v126
    %v205 = vmul.f32 %v119, %v129
    %v206 = vmul.f32 %v120, %v130
    %v207 = vmul.f32 %v203, %v205
    %v208 = vmul.f32 %v204, %v206
    %v209 = vmul.f32 %v201, %v205
    %v210 = vmul.f32 %v202, %v206
    %v211 = vadd.f32 %v207, %v209
    %v212 = vadd.f32 %v208, %v210
    %v213 = vmul.f32 %v201, %v203
    %v214 = vmul.f32 %v202, %v204
    %v215 = vadd.f32 %v211, %v213
    %v216 = vadd.f32 %v212, %v214
    %v217 = vmul.f32 %v215, 0.5
    %v218 = vmul.f32 %v216, 0.5
    %v219 = vmul.f32 %v217, %v135
    %v220 = vmul.f32 %v218, %v136
    %v221 = vmul.f32 %v113, 0.015625
    %v222 = vmul.f32 %v114, 0.015625
    %v223 = vsub.f32 0.125, %v221
    %v224 = vsub.f32 0.125, %v222
    %v225 = vmul.f32 %v111, %v223
    %v226 = vmul.f32 %v112, %v224
    %v227 = vadd.f32 %v225, 0.5
    %v228 = vadd.f32 %v226, 0.5
    %v229 = vmul.f32 %v111, %v227
    %v230 = vmul.f32 %v112, %v228
    %v231 = vadd.f32 %v229, %v219
    %v232 = vadd.f32 %v230, %v220
    %v233 = vadd.f32 %v91, 1e-08
    %v234 = vadd.f32 %v92, 1e-08
    %v235 = vmul.f32 %v233, %v93
    %v236 = vmul.f32 %v234, %v94
    %v237 = vrcp.pop %v235
    %v238 = vrcp.pop %v236
    %v239 = vmul.f32 %v95, %v103
    %v240 = vmul.f32 %v96, %v104
    %v241 = vmul.f32 %v237, %v239
    %v242 = vmul.f32 %v238, %v240
    %v243 = vmul.f32 %v241, %v93
    %v244 = vmul.f32 %v242, %v94
    %v245 = vmul.f32 %v231, 1.442695
    %v246 = vpow.pop %v245
    %v247 = vmul.f32 %v232, 1.442695
    %v248 = vpow.pop %v247
    %v249 = vsub.f32 %v246, 1.0
    %v250 = vsub.f32 %v248, 1.0
    %v251 = vmul.f32 %v249, 2.0
    %v252 = vmul.f32 %v250, 2.0
    %v253 = vmul.f32 %v251, %v243
    %v254 = vmul.f32 %v252, %v244
    %v255 = vmin.f32 %v253, %v241
    %v256 = vmin.f32 %v254, %v242
    %257 = vmin.xlane.f32.xlu0 %v255
    %v258 = vpop.xlane.xlu0 %257
    %259 = vmin.xlane.f32.xlu0 %v256
    %v260 = vpop.xlane.xlu0 %259
    %v261 = vmin.f32 %v258, %v260
    %v262 = vrot.slane %v261, 4
    %v263 = vmin.f32 %v261, %v262
    %v264 = vrot.slane %v263, 2
    %v265 = vmin.f32 %v263, %v264
    %v266 = vrot.slane %v265, 1
    %v267 = vmin.f32 %v265, %v266
    %v268 = vrsqrt.pop %v267
    %v269 = vmul.f32 %v267, %v268
    %vm270 = vcmp.eq.f32.partialorder %v267, inf
    %v271 = vsel %vm270, %v267, %v269
    %vm272 = vcmp.eq.f32.partialorder %v267, 0.0
    %v273 = vand.u32 %v267, 2147483648
    %v274 = vsel %vm272, %v273, %v271
    %v275 = vmul.f32 %v274, %v189
    %v276 = vmul.f32 %v274, %v190
    %v277 = vmin.f32 %v275, %v101
    %v278 = vmin.f32 %v276, %v102
    %v279 = vadd.f32 %v199, %v277
    %v280 = vadd.f32 %v200, %v278
    %281 = vadd.xlane.f32.xlu0 %v279
    %v282 = vpop.xlane.xlu0 %281
    %283 = vadd.xlane.f32.xlu0 %v280
    %v284 = vpop.xlane.xlu0 %283
    %v285 = vadd.f32 %v282, %v284
    %v286 = vrot.slane %v285, 4
    %v287 = vadd.f32 %v285, %v286
    %v288 = vrot.slane %v287, 2
    %v289 = vadd.f32 %v287, %v288
    %v290 = vrot.slane %v289, 1
    %v291 = vadd.f32 %v289, %v290
    %v292 = vmul.f32 %v291, 0.00048828125
    %vm293 = vcmask 0
    %294 = vst.msk [vmem:[#allocation11] sm:$0x1] %vm293, %v292
    // Predicated region
    $region42: #{tpu_custom_call.1} parent=1 // pred_check
      _
    $region43: #{tpu_custom_call.1} parent=1 // pred_check_branch
      %296 = sbr.rel (0) target = $region45
    $region44: #{tpu_custom_call.1} parent=1 // pred_region
      %s298 = ssub.s32 16, 16
      %299 = vsyncadd [#allocation4], %s298
      %s301 = sshll.u32 [#allocation11], 4
      %s302 = int_to_ptr.vmem [resolvable:$true] %s301
      %304 = dma.vmem_to_hbm [thread:$0]  %s302, 16, %s5, [#allocation4]
    $region45: #{tpu_custom_call.1} parent=1 // pred_fallthru
      _
    // Predicated region
    $region46: #{tpu_custom_call.1} parent=1 // pred_check
      _
    $region47: #{tpu_custom_call.1} parent=1 // pred_check_branch
      %306 = sbr.rel (0) target = $region49
    $region48: #{tpu_custom_call.1} parent=1 // pred_region
      %307 = dma.done [#allocation4], 16
    $region49: #{tpu_custom_call.1} parent=1 // pred_fallthru
      _
    %308 = vsyncpa [#allocation3], 1
    %309 = vsyncpa [#allocation6], 1
    %310 = vsyncpa [#allocation9], 1
    %311 = vsyncpa [#allocation4], 1

</llo_original>
